<compile_context>
chip_gen: v5e
topology: v5e:2x2
jax: 0.10.0
libtpu: 0.0.40
codegen_flags: <defaults>
</compile_context>

<pallas_src>
import math

import jax
import jax.numpy as jnp
from jax import lax
from jax.experimental import pallas as pl
from jax.experimental.pallas import tpu as pltpu

_EPS = 1e-12
_MIN_PALLAS_BYTES = 1 << 20   # below this, plain-XLA fusion beats kernel overhead
_MIN_GRID_STEPS = 8           # aim for >=8 row tiles (pipelining + megacore)


def _round_up(x, m):
    return ((x + m - 1) // m) * m


def _round_down(x, m):
    return (x // m) * m


def _vmem_budgets():
    """(double-buffer tile budget, vmem_limit_bytes), generation-aware."""
    try:
        cap = pltpu.get_tpu_info().vmem_capacity_bytes
    except Exception:
        cap = 64 * 1024 * 1024  # assume the tightest generation (v7x: 64 MiB)
    if cap >= 96 * 1024 * 1024:  # v5e / v6e: 128 MiB physical VMEM
        return 24 * 1024 * 1024, 64 * 1024 * 1024
    # v7x: 64 MiB physical, default scoped 32 MiB -> stay well clear
    return 10 * 1024 * 1024, 36 * 1024 * 1024


def _l2norm_kernel(x_ref, o_ref):
    # x_ref, o_ref: (tile_n, d) block resident in VMEM.
    x = x_ref[...].astype(jnp.float32)
    ss = jnp.sum(x * x, axis=1, keepdims=True)          # VPU mul + XLU row reduce
    # Exact equivalent of 1 / max(sqrt(ss), eps) for ss >= 0.
    inv = lax.rsqrt(jnp.maximum(ss, _EPS * _EPS))        # single EUP op, full precision
    o_ref[...] = (x * inv).astype(o_ref.dtype)


def _l2_normalize_rows_jnp(x2):
    xf = x2.astype(jnp.float32)
    ss = jnp.sum(xf * xf, axis=1, keepdims=True)
    inv = lax.rsqrt(jnp.maximum(ss, _EPS * _EPS))
    return (xf * inv).astype(x2.dtype)


def pattern_norm(x, scale=1.0, *, force_pallas=False):
    """JAX/Pallas equivalent of the PyTorch pattern_norm module.

    `scale` is kept for API parity with the PyTorch module but (like the
    original) is unused in the forward pass.
    """
    del scale
    sizes = x.shape
    if len(sizes) <= 2:
        return x

    n = sizes[0]
    d = math.prod(sizes[1:])
    itemsize = jnp.dtype(x.dtype).itemsize
    x2 = x.reshape(n, d)

    # Tiny inputs: fixed pallas_call + per-step overhead dominates; let XLA
    # fuse square/sum/rsqrt/mul instead.
    if not force_pallas and n * d * itemsize < _MIN_PALLAS_BYTES:
        return _l2_normalize_rows_jnp(x2).reshape(sizes)

    # Sublane packing: 8 rows for 4-byte dtypes, 16 for 2-byte, 32 for 1-byte.
    packing = max(8, 32 // itemsize)

    # VMEM working set per element of a block: double-buffered input +
    # double-buffered output (at the array dtype) + ~3 live f32 temporaries
    # inside the kernel (upcast, squares, scaled result).
    bytes_per_elem = 4 * itemsize + 12
    dbuf_budget, vmem_limit = _vmem_budgets()

    tile_cap = _round_down(dbuf_budget // (d * bytes_per_elem), packing)
    if tile_cap < packing:
        # TODO(synk): D too wide for a single-row-tile pass; needs a two-pass
        # D-split kernel.  Fall back to plain jnp rather than overflow VMEM.
        return _l2_normalize_rows_jnp(x2).reshape(sizes)

    # Shrink the tile so the grid has multiple steps (pipelining; lets the
    # "parallel" row axis shard across v7x's two TensorCores), but never below
    # one packed sublane group.
    desired = _round_up(pl.cdiv(n, _MIN_GRID_STEPS), packing)
    tile_n = max(packing, min(tile_cap, desired))
    grid = (pl.cdiv(n, tile_n),)

    out = pl.pallas_call(
        _l2norm_kernel,
        out_shape=jax.ShapeDtypeStruct((n, d), x.dtype),
        grid=grid,
        # Block last dim == full D (divisible-or-full-dim rule); ragged last
        # row block is masked by Pallas (per-row reduction => garbage rows are
        # row-local and their writes are dropped).
        in_specs=[pl.BlockSpec((tile_n, d), lambda i: (i, 0))],
        out_specs=pl.BlockSpec((tile_n, d), lambda i: (i, 0)),
        compiler_params=pltpu.CompilerParams(
            dimension_semantics=("parallel",),
            vmem_limit_bytes=vmem_limit,
        ),
    )(x2)

    return out.reshape(sizes)


def _reference(x):
    sizes = x.shape
    if len(sizes) <= 2:
        return x
    x2 = x.reshape(sizes[0], -1).astype(jnp.float32)
    norm = jnp.sqrt(jnp.sum(x2 * x2, axis=1, keepdims=True))
    y = x2 / jnp.maximum(norm, _EPS)
    return y.reshape(sizes).astype(x.dtype)


def _check(y, y_ref, atol, rtol):
    assert y.shape == y_ref.shape
    assert jnp.allclose(
        y.astype(jnp.float32), y_ref.astype(jnp.float32), atol=atol, rtol=rtol
    ), "mismatch vs reference"


if __name__ == "__main__":
    # 1) Module's typical small NCHW shape -> tiny-input fast path.
    x_small = jax.random.normal(jax.random.PRNGKey(0), (2, 4, 16, 16), dtype=jnp.float32)
    y_small = jax.block_until_ready(pattern_norm(x_small))
    _check(y_small, _reference(x_small), atol=1e-6, rtol=1e-5)

    # 2) Same shape, forced through the Pallas kernel (ragged row block: N=2 < 8).
    y_small_pl = jax.block_until_ready(pattern_norm(x_small, force_pallas=True))
    _check(y_small_pl, _reference(x_small), atol=1e-6, rtol=1e-3)

    # 3) Larger shape that takes the Pallas path by default (multi-step grid).
    x_big = jax.random.normal(jax.random.PRNGKey(1), (64, 8, 32, 32), dtype=jnp.float32)
    y_big = jax.block_until_ready(pattern_norm(x_big))
    _check(y_big, _reference(x_big), atol=1e-6, rtol=1e-3)
    row_norms = jnp.sqrt(
        jnp.sum(y_big.reshape(x_big.shape[0], -1).astype(jnp.float32) ** 2, axis=1)
    )
    assert jnp.allclose(row_norms, 1.0, atol=1e-3)

    # 4) Ragged everything: N not a multiple of 8, D not a multiple of 128.
    x_odd = jax.random.normal(jax.random.PRNGKey(2), (3, 5, 7, 9), dtype=jnp.float32)
    y_odd = jax.block_until_ready(pattern_norm(x_odd, force_pallas=True))
    _check(y_odd, _reference(x_odd), atol=1e-6, rtol=1e-3)

    # 5) bf16 input (exercises sublane-packing-aware tile rounding).
    x_bf = jax.random.normal(jax.random.PRNGKey(3), (17, 4, 16, 16), dtype=jnp.bfloat16)
    y_bf = jax.block_until_ready(pattern_norm(x_bf, force_pallas=True))
    _check(y_bf, _reference(x_bf), atol=1e-2, rtol=1e-2)

    # 6) <=2-D inputs pass through untouched.
    x_2d = jax.random.normal(jax.random.PRNGKey(4), (4, 32), dtype=jnp.float32)
    assert pattern_norm(x_2d) is x_2d

    print("KERNEL_OK")
</pallas_src>

<mosaic_0001>
module attributes {stable_mosaic.version = 11 : i64} {
  func.func @_l2norm_kernel(%arg0: i32, %arg1: memref<8x1024xf32, #tpu.memory_space<vmem>>, %arg2: memref<8x1024xf32, #tpu.memory_space<vmem>>) attributes {dimension_semantics = [#tpu.dimension_semantics<parallel>], iteration_bounds = array<i64: 1>, scalar_prefetch = 0 : i64, scratch_operands = 0 : i64, tpu.core_type = #tpu.core_type<tc>, window_params = [{transform_indices = @transform_0, window_bounds = array<i64: 8, 1024>}, {transform_indices = @transform_1, window_bounds = array<i64: 8, 1024>}]} {
    %c0 = arith.constant 0 : index
    %c0_0 = arith.constant 0 : index
    %0 = vector.load %arg1[%c0, %c0_0] : memref<8x1024xf32, #tpu.memory_space<vmem>>, vector<8x1024xf32>
    %1 = arith.mulf %0, %0 : vector<8x1024xf32>
    %cst = arith.constant dense<0.000000e+00> : vector<8xf32>
    %2 = vector.multi_reduction <add>, %1, %cst [1] : vector<8x1024xf32> to vector<8xf32>
    %3 = vector.shape_cast %2 : vector<8xf32> to vector<8x1xf32>
    %cst_1 = arith.constant 1.000000e-24 : f32
    %4 = vector.broadcast %cst_1 : f32 to vector<8x1xf32>
    %5 = arith.maximumf %3, %4 : vector<8x1xf32>
    %6 = math.rsqrt %5 : vector<8x1xf32>
    %7 = vector.broadcast %6 : vector<8x1xf32> to vector<8x1024xf32>
    %8 = arith.mulf %0, %7 : vector<8x1024xf32>
    %c0_2 = arith.constant 0 : index
    %c0_3 = arith.constant 0 : index
    %9 = vector.load %arg2[%c0_2, %c0_3] : memref<8x1024xf32, #tpu.memory_space<vmem>>, vector<8x1024xf32>
    tpu.vector_store %arg2[%c0_2, %c0_3], %8 {strides = array<i32>} : memref<8x1024xf32, #tpu.memory_space<vmem>>, vector<8x1024xf32>,
    return
  }
  func.func @transform_0(%arg0: i32) -> (i32, i32) {
    %c0_i32 = arith.constant 0 : i32
    %c0_i32_0 = arith.constant 0 : i32
    return %arg0, %c0_i32 : i32, i32
  }
  func.func @transform_1(%arg0: i32) -> (i32, i32) {
    %c0_i32 = arith.constant 0 : i32
    %c0_i32_0 = arith.constant 0 : i32
    return %arg0, %c0_i32 : i32, i32
  }
}

</mosaic_0001>

<llo_original>
// kernel: tpu_custom_call.1
$region0: #{tpu_custom_call.1}
  #allocation0 [shape = 'u32[]', space=smem, size = 0x4, offset = 0x4, fixed_abs, tag = 'smem constant byte address 0x4 - core index']
  #allocation1 [shape = 'u32[72,128]{1,0:T(1,128)}', space=vmem, size = 0x9000, scoped, tag = 'internal scratch']
  %s0 = inlined_call_operand.hbm [shape: f32[2,1024], index: 0, kind: input, shape index: {}]
  %s1 = inlined_call_operand.hbm [shape: f32[2,1024], index: 1, kind: output, shape index: {}]
  %s2 = sld [smem:[#allocation0]]
  $region18: #{tpu_custom_call.1} parent=0
    _
  %s4 = ssub.s32 1, %s2
  %s5 = scalar_select 0, %s4, %s2
  $region1: #{tpu_custom_call.1} parent=0
    #allocation2 [shape = 'u8[32768]{0}', space=vmem, size = 0x8000, scoped, tag = 'input window, operand 0, single buffered']
    #allocation3 [shape = 's32[1]{0}', space=sflag, size = 0x4, scoped, tag = 'scoped memory for tpu_custom_call.1']
    #allocation4 [shape = 's32[1]{0}', space=sflag, size = 0x4, scoped, tag = 'scoped memory for tpu_custom_call.1']
    #allocation5 [shape = 'u8[32768]{0}', space=vmem, size = 0x8000, scoped, tag = 'output window, operand 0, single buffered']
    %6 = vsyncpa [#allocation3], 0
    %7 = vsyncpa [#allocation4], 0
    // Predicated region
    $region2: #{tpu_custom_call.1} parent=1 // pred_check
      _
    $region3: #{tpu_custom_call.1} parent=1 // pred_check_branch
      %9 = sbr.rel (0) target = $region5
    $region4: #{tpu_custom_call.1} parent=1 // pred_region
      %11 = vsyncadd [#allocation3], 768
      %s12 = sshll.u32 %s0, 4
      %s13 = int_to_ptr.hbm [resolvable:$true] %s12
      %s14 = sshll.u32 [#allocation2], 4
      %s15 = int_to_ptr.vmem [resolvable:$true] %s14
      %20 = dma.hbm_to_vmem [thread:$0]  %s13, 256, %s15, [#allocation3], 256, 256, 16
    $region5: #{tpu_custom_call.1} parent=1 // pred_fallthru
      _
    // Predicated region
    $region6: #{tpu_custom_call.1} parent=1 // pred_check
      _
    $region7: #{tpu_custom_call.1} parent=1 // pred_check_branch
      %22 = sbr.rel (0) target = $region9
    $region8: #{tpu_custom_call.1} parent=1 // pred_region
      %24 = dma.done [#allocation3], 1024
    $region9: #{tpu_custom_call.1} parent=1 // pred_fallthru
      _
    %v25 = vld [vmem:[#allocation2] sm:$0xff]
    %v26 = vld [vmem:[#allocation2 + $0x8] sm:$0xff]
    %v27 = vld [vmem:[#allocation2 + $0x10] sm:$0xff]
    %v28 = vld [vmem:[#allocation2 + $0x18] sm:$0xff]
    %v29 = vld [vmem:[#allocation2 + $0x20] sm:$0xff]
    %v30 = vld [vmem:[#allocation2 + $0x28] sm:$0xff]
    %v31 = vld [vmem:[#allocation2 + $0x30] sm:$0xff]
    %v32 = vld [vmem:[#allocation2 + $0x38] sm:$0xff]
    %v33 = vmul.f32 %v25, %v25
    %v34 = vmul.f32 %v26, %v26
    %v35 = vmul.f32 %v27, %v27
    %v36 = vmul.f32 %v28, %v28
    %v37 = vmul.f32 %v29, %v29
    %v38 = vmul.f32 %v30, %v30
    %v39 = vmul.f32 %v31, %v31
    %v40 = vmul.f32 %v32, %v32
    %49 = vst [vmem:[#allocation1] ss:$4 sm:$0xff] %v33
    %s50 = scalar_lea.vmem [#allocation1], 1
    %51 = vst [vmem:[%s50] ss:$4 sm:$0xff] %v35
    %s52 = scalar_lea.vmem [#allocation1], 2
    %53 = vst [vmem:[%s52] ss:$4 sm:$0xff] %v37
    %s54 = scalar_lea.vmem [#allocation1], 3
    %55 = vst [vmem:[%s54] ss:$4 sm:$0xff] %v39
    %s56 = scalar_lea.vmem [#allocation1], 32
    %57 = vst [vmem:[%s56] ss:$4 sm:$0xff] %v34
    %s58 = scalar_lea.vmem [#allocation1], 33
    %59 = vst [vmem:[%s58] ss:$4 sm:$0xff] %v36
    %s60 = scalar_lea.vmem [#allocation1], 34
    %61 = vst [vmem:[%s60] ss:$4 sm:$0xff] %v38
    %s62 = scalar_lea.vmem [#allocation1], 35
    %63 = vst [vmem:[%s62] ss:$4 sm:$0xff] %v40
    %v64 = vld.sshfl [vmem:[#allocation1] sm:$0xff pattern:$0x73625140]
    %v65 = vld.sshfl [vmem:[#allocation1 + $0x8] sm:$0xff pattern:$0x73625140]
    %v66 = vld.sshfl [vmem:[#allocation1 + $0x10] sm:$0xff pattern:$0x73625140]
    %v67 = vld.sshfl [vmem:[#allocation1 + $0x18] sm:$0xff pattern:$0x73625140]
    %v68 = vld.sshfl [vmem:[#allocation1 + $0x20] sm:$0xff pattern:$0x73625140]
    %v69 = vld.sshfl [vmem:[#allocation1 + $0x28] sm:$0xff pattern:$0x73625140]
    %v70 = vld.sshfl [vmem:[#allocation1 + $0x30] sm:$0xff pattern:$0x73625140]
    %v71 = vld.sshfl [vmem:[#allocation1 + $0x38] sm:$0xff pattern:$0x73625140]
    %v80 = vadd.f32 %v64, %v65
    %v81 = vadd.f32 %v80, %v66
    %v82 = vadd.f32 %v81, %v67
    %v83 = vadd.f32 %v82, %v68
    %v84 = vadd.f32 %v83, %v69
    %v85 = vadd.f32 %v84, %v70
    %v86 = vadd.f32 %v85, %v71
    %87 = vadd.xlane.f32.xlu0 %v86
    %v88 = vpop.xlane.xlu0 %87
    %v89 = vmax.f32 %v88, 1e-24
    %v90 = vrsqrt.pop %v89
    %v91 = vmul.f32 %v90, %v89
    %v92 = vmul.f32 %v91, %v90
    %v93 = vmul.f32 0.5, %v92
    %v94 = vsub.f32 1.5, %v93
    %v95 = vmul.f32 %v90, %v94
    %vm96 = vweird.f32 %v89
    %vm97 = vweird.f32 %v90
    %vm98 = vmor %vm96, %vm97
    %v99 = vsel %vm98, %v90, %v95
    %v102 = vunpack.c.l.s4 269488144
    %v103 = vunpack.c.0.s8 %v102
    %v104 = vperm.slane %v99, %v103
    %v106 = vunpack.c.l.s4 842150450
    %v107 = vunpack.c.0.s8 %v106
    %v108 = vperm.slane %v99, %v107
    %v110 = vunpack.c.l.s4 1414812756
    %v111 = vunpack.c.0.s8 %v110
    %v112 = vperm.slane %v99, %v111
    %v114 = vunpack.c.l.s4 1987475062
    %v115 = vunpack.c.0.s8 %v114
    %v116 = vperm.slane %v99, %v115
    %v121 = vmul.f32 %v25, %v104
    %v122 = vmul.f32 %v26, %v104
    %v123 = vmul.f32 %v27, %v108
    %v124 = vmul.f32 %v28, %v108
    %v125 = vmul.f32 %v29, %v112
    %v126 = vmul.f32 %v30, %v112
    %v127 = vmul.f32 %v31, %v116
    %v128 = vmul.f32 %v32, %v116
    %129 = vst [vmem:[#allocation5] sm:$0xff] %v121
    %130 = vst [vmem:[#allocation5 + $0x8] sm:$0xff] %v122
    %131 = vst [vmem:[#allocation5 + $0x10] sm:$0xff] %v123
    %132 = vst [vmem:[#allocation5 + $0x18] sm:$0xff] %v124
    %133 = vst [vmem:[#allocation5 + $0x20] sm:$0xff] %v125
    %134 = vst [vmem:[#allocation5 + $0x28] sm:$0xff] %v126
    %135 = vst [vmem:[#allocation5 + $0x30] sm:$0xff] %v127
    %136 = vst [vmem:[#allocation5 + $0x38] sm:$0xff] %v128
    // Predicated region
    $region10: #{tpu_custom_call.1} parent=1 // pred_check
      _
    $region11: #{tpu_custom_call.1} parent=1 // pred_check_branch
      %138 = sbr.rel (0) target = $region13
    $region12: #{tpu_custom_call.1} parent=1 // pred_region
      %140 = vsyncadd [#allocation4], 768
      %s141 = sshll.u32 [#allocation5], 4
      %s142 = int_to_ptr.vmem [resolvable:$true] %s141
      %s143 = sshll.u32 %s1, 4
      %s144 = int_to_ptr.hbm [resolvable:$true] %s143
      %149 = dma.vmem_to_hbm [thread:$0]  %s142, 256, %s144, [#allocation4], 256, 256, 16
    $region13: #{tpu_custom_call.1} parent=1 // pred_fallthru
      _
    // Predicated region
    $region14: #{tpu_custom_call.1} parent=1 // pred_check
      _
    $region15: #{tpu_custom_call.1} parent=1 // pred_check_branch
      %151 = sbr.rel (0) target = $region17
    $region16: #{tpu_custom_call.1} parent=1 // pred_region
      %153 = dma.done [#allocation4], 1024
    $region17: #{tpu_custom_call.1} parent=1 // pred_fallthru
      _
    %154 = vsyncpa [#allocation3], 1
    %155 = vsyncpa [#allocation4], 1

</llo_original>
